<compile_context>
chip_gen: v7x
topology: tpu7x:2x2x1
jax: 0.10.0
libtpu: 0.0.40
codegen_flags: <defaults>
</compile_context>

<pallas_src>
import numpy as np
import jax
import jax.numpy as jnp
from jax.experimental import pallas as pl
from jax.experimental.pallas import tpu as pltpu


def _make_pe(d_model: int, max_len: int = 5000) -> jnp.ndarray:
    """Deterministic positional-encoding buffer, identical to the PyTorch __init__."""
    assert d_model % 2 == 0, "PositionalEncoding (sin/cos interleave) requires even d_model"
    position = jnp.arange(0, max_len, dtype=jnp.float32)[:, None]            # (max_len, 1)
    div_term = jnp.exp(
        jnp.arange(0, d_model, 2, dtype=jnp.float32) * (-np.log(10000.0) / d_model)
    )                                                                         # (d_model/2,)
    angles = position * div_term                                              # (max_len, d_model/2)
    pe = jnp.stack([jnp.sin(angles), jnp.cos(angles)], axis=-1).reshape(max_len, d_model)
    return pe.astype(jnp.float32)


# ------------------------- hardware-aware budgets ---------------------------

def _vmem_capacity_bytes() -> int:
    try:
        cap = int(pltpu.get_tpu_info().vmem_capacity_bytes)
        if cap > 0:
            return cap
    except Exception:
        pass
    return 64 * 1024 * 1024  # conservative fallback: v7x per-TensorCore VMEM


_VMEM_CAP = _vmem_capacity_bytes()
# ~6 MiB blocks sit on the ~85% HBM-roofline plateau (v5e/v6e) and amortize the ~0.35 us
# per-grid-step overhead on v7x, while 2x(x+pe+out) buffers stay < ~50 MiB (fits v7x's 64 MiB).
_TILE_BYTES = int(min(6 * 1024 * 1024, max(2 * 1024 * 1024, _VMEM_CAP // 10)))


def _sublane_pack(itemsize: int) -> int:
    # f32 -> 8, bf16 -> 16, int8/fp8 -> 32 (rows pack along sublanes for sub-32-bit dtypes)
    return 8 * max(1, 4 // max(1, itemsize))


def _vmem_limit_bytes(per_step_block_bytes: int) -> int:
    need = int(per_step_block_bytes * 2 * 1.3) + (2 << 20)   # double-buffered blocks + headroom
    return int(max(16 * 1024 * 1024, min(need, int(_VMEM_CAP * 0.9))))


# ----------------------------- kernels --------------------------------------

def _add_pe_seq_kernel(x_ref, pe_ref, o_ref):
    # x_ref/o_ref: (ts, D) -- batch dim squeezed; pe_ref: (ts, D), already in x.dtype.
    o_ref[...] = x_ref[...] + pe_ref[...]


def _add_pe_flat_kernel(x_ref, pe_ref, o_ref):
    # x_ref/o_ref: (tb, tf); pe_ref: (1, tf) broadcast over the batch rows.
    o_ref[...] = x_ref[...] + pe_ref[...]


# -------------------------- tiling heuristics --------------------------------

def _pick_seq_tile(B: int, S: int, D: int, itemsize: int) -> int:
    pack = _sublane_pack(itemsize)
    rows = _TILE_BYTES // max(1, D * itemsize)        # byte-budgeted, no fixed row cap
    rows = min(S, max(8, rows))
    align = pack if rows >= pack else 8               # 8 is the hard layout requirement
    rows = max(8, (rows // align) * align)
    # v7x: with B == 1 the batch axis cannot feed the second TensorCore -> split the seq axis.
    if B == 1 and S >= 16 and pl.cdiv(S, rows) < 2:
        rows = max(8, ((S // 2 + 7) // 8) * 8)
    return rows


def _pick_flat_tiles(B: int, F: int, itemsize: int):
    pack = _sublane_pack(itemsize)
    if F <= 128:
        tf = F
    else:
        cap = max(128, (_TILE_BYTES // (min(B, 8) * itemsize)) // 128 * 128)
        tf = max(128, min((F // 128) * 128, cap))     # lane-dense chunks; last block masked
    rows_budget = max(8, _TILE_BYTES // max(1, tf * itemsize))
    if B <= rows_budget:
        tb = B
    else:
        tb = max(pack, (min(rows_budget, 512) // pack) * pack)
    return tb, tf


# ------------------------------ wrapper --------------------------------------

@jax.jit
def positional_encoding_forward(x: jnp.ndarray, pe: jnp.ndarray) -> jnp.ndarray:
    """x: (B, S, D); pe: (max_len, D) float32 buffer. Returns x + pe[:S], dtype == x.dtype."""
    B, S, D = x.shape
    max_len, d_pe = pe.shape
    assert d_pe == D and S <= max_len
    itemsize = x.dtype.itemsize

    if D % 128 == 0 and S >= 8:
        # Lane-dense d_model: tile the sequence axis, window pe straight out of its buffer.
        # pe is pre-cast to x.dtype wrapper-side (one-time S*D slab) so the pe tile DMA/VMEM
        # matches x and the kernel needs no cast.  NOTE: for bf16 x this performs the add in
        # bf16 (tiny rounding deviation vs. the f32-pe PyTorch add) -- intentional trade for
        # halved pe bandwidth; add in f32 in-kernel if bit-closeness matters more.
        pe_in = pe if pe.dtype == x.dtype else pe[:S].astype(x.dtype)
        ts = _pick_seq_tile(B, S, D, itemsize)
        n_s = pl.cdiv(S, ts)
        block_bytes = 3 * ts * D * itemsize           # x + pe + out blocks per grid step
        return pl.pallas_call(
            _add_pe_seq_kernel,
            out_shape=jax.ShapeDtypeStruct((B, S, D), x.dtype),
            grid_spec=pltpu.PrefetchScalarGridSpec(
                num_scalar_prefetch=0,
                grid=(n_s, B),   # batch innermost: pe block index constant across it -> one fetch
                in_specs=[
                    pl.BlockSpec((pl.Squeezed(), ts, D), lambda s, b: (b, s, 0)),
                    pl.BlockSpec((ts, D), lambda s, b: (s, 0)),
                ],
                out_specs=pl.BlockSpec((pl.Squeezed(), ts, D), lambda s, b: (b, s, 0)),
            ),
            compiler_params=pltpu.CompilerParams(
                dimension_semantics=("parallel", "parallel"),
                vmem_limit_bytes=_vmem_limit_bytes(block_bytes),
            ),
            cost_estimate=pl.CostEstimate(
                flops=B * S * D,
                transcendentals=0,
                bytes_accessed=(2 * B + 1) * S * D * itemsize,
            ),
        )(x, pe_in)

    # Fallback (small / non-128-multiple d_model or very short sequences): flatten (S, D) -> F
    # so stores are lane-dense (>=128 wide) instead of masked vst on a narrow last dim, and
    # tile the batch axis so large-B workloads stay inside the VMEM budget.
    F = S * D
    x_flat = x.reshape(B, F)
    pe_row = pe[:S].astype(x.dtype).reshape(1, F)     # small one-time slab in x.dtype
    tb, tf = _pick_flat_tiles(B, F, itemsize)
    n_f = pl.cdiv(F, tf)
    n_b = pl.cdiv(B, tb)
    block_bytes = (2 * tb + 1) * tf * itemsize
    # TODO(synk): for 1 < B < 8 the (tb, tf) block leaves sublanes empty; folding batch into the
    # flattened axis (tf | F) would make blocks fully (8,128)-dense at the cost of divisibility plumbing.
    out_flat = pl.pallas_call(
        _add_pe_flat_kernel,
        out_shape=jax.ShapeDtypeStruct((B, F), x.dtype),
        grid_spec=pltpu.PrefetchScalarGridSpec(
            num_scalar_prefetch=0,
            grid=(n_f, n_b),  # batch innermost: pe block reused across batch tiles
            in_specs=[
                pl.BlockSpec((tb, tf), lambda f, b: (b, f)),
                pl.BlockSpec((1, tf), lambda f, b: (0, f)),
            ],
            out_specs=pl.BlockSpec((tb, tf), lambda f, b: (b, f)),
        ),
        compiler_params=pltpu.CompilerParams(
            dimension_semantics=("parallel", "parallel"),
            vmem_limit_bytes=_vmem_limit_bytes(block_bytes),
        ),
        cost_estimate=pl.CostEstimate(
            flops=B * F,
            transcendentals=0,
            bytes_accessed=(2 * B + 1) * F * itemsize,
        ),
    )(x_flat, pe_row)
    return out_flat.reshape(B, S, D)


if __name__ == "__main__":
    max_len = 64  # functionally identical to 5000 since only the first S rows are read

    # Case 1: small d_model (D % 128 != 0) -> flattened lane-dense path.
    B, S, D = 2, 8, 32
    pe = _make_pe(D, max_len)
    x = jax.random.normal(jax.random.PRNGKey(0), (B, S, D), dtype=jnp.float32)
    out = jax.block_until_ready(positional_encoding_forward(x, pe))
    ref = x + pe[None, :S, :]
    assert out.shape == (B, S, D) and out.dtype == x.dtype
    np.testing.assert_allclose(np.asarray(out), np.asarray(ref), rtol=1e-6, atol=1e-6)

    # Case 2: lane-dense d_model (D % 128 == 0) -> seq-tiled path.
    B2, S2, D2 = 2, 16, 128
    pe2 = _make_pe(D2, max_len)
    x2 = jax.random.normal(jax.random.PRNGKey(1), (B2, S2, D2), dtype=jnp.float32)
    out2 = jax.block_until_ready(positional_encoding_forward(x2, pe2))
    ref2 = x2 + pe2[None, :S2, :]
    assert out2.shape == (B2, S2, D2) and out2.dtype == x2.dtype
    np.testing.assert_allclose(np.asarray(out2), np.asarray(ref2), rtol=1e-6, atol=1e-6)

    # Case 3: B == 1 -> seq axis force-split so both v7x TensorCores get work.
    B3, S3, D3 = 1, 32, 128
    x3 = jax.random.normal(jax.random.PRNGKey(2), (B3, S3, D3), dtype=jnp.float32)
    out3 = jax.block_until_ready(positional_encoding_forward(x3, pe2))
    ref3 = x3 + pe2[None, :S3, :]
    np.testing.assert_allclose(np.asarray(out3), np.asarray(ref3), rtol=1e-6, atol=1e-6)

    # Case 4: bf16 input -> pe pre-cast path (add performed in bf16).
    x4 = jax.random.normal(jax.random.PRNGKey(3), (2, 16, 128), dtype=jnp.bfloat16)
    out4 = jax.block_until_ready(positional_encoding_forward(x4, pe2))
    ref4 = x4 + pe2[None, :16, :].astype(jnp.bfloat16)
    assert out4.dtype == jnp.bfloat16
    np.testing.assert_allclose(np.asarray(out4, dtype=np.float32),
                               np.asarray(ref4, dtype=np.float32), rtol=0, atol=1e-2)

    print("KERNEL_OK")
</pallas_src>

<mosaic_0001>
module attributes {stable_mosaic.version = 11 : i64} {
  func.func @_add_pe_flat_kernel(%arg0: i32, %arg1: i32, %arg2: memref<2x256xf32, #tpu.memory_space<vmem>>, %arg3: memref<1x256xf32, #tpu.memory_space<vmem>>, %arg4: memref<2x256xf32, #tpu.memory_space<vmem>>) attributes {dimension_semantics = [#tpu.dimension_semantics<parallel>, #tpu.dimension_semantics<parallel>], iteration_bounds = array<i64: 1, 1>, scalar_prefetch = 0 : i64, scratch_operands = 0 : i64, tpu.core_type = #tpu.core_type<tc>, window_params = [{transform_indices = @transform_0, window_bounds = array<i64: 2, 256>}, {transform_indices = @transform_1, window_bounds = array<i64: 1, 256>}, {transform_indices = @transform_2, window_bounds = array<i64: 2, 256>}]} {
    %c0 = arith.constant 0 : index
    %c0_0 = arith.constant 0 : index
    %0 = vector.load %arg2[%c0, %c0_0] : memref<2x256xf32, #tpu.memory_space<vmem>>, vector<2x256xf32>
    %c0_1 = arith.constant 0 : index
    %c0_2 = arith.constant 0 : index
    %1 = vector.load %arg3[%c0_1, %c0_2] : memref<1x256xf32, #tpu.memory_space<vmem>>, vector<1x256xf32>
    %2 = vector.broadcast %1 : vector<1x256xf32> to vector<2x256xf32>
    %3 = arith.addf %0, %2 : vector<2x256xf32>
    %c0_3 = arith.constant 0 : index
    %c0_4 = arith.constant 0 : index
    %4 = vector.load %arg4[%c0_3, %c0_4] : memref<2x256xf32, #tpu.memory_space<vmem>>, vector<2x256xf32>
    tpu.vector_store %arg4[%c0_3, %c0_4], %3 {strides = array<i32>} : memref<2x256xf32, #tpu.memory_space<vmem>>, vector<2x256xf32>,
    return
  }
  func.func @transform_0(%arg0: i32, %arg1: i32) -> (i32, i32) {
    %c0_i32 = arith.constant 0 : i32
    return %arg1, %arg0 : i32, i32
  }
  func.func @transform_1(%arg0: i32, %arg1: i32) -> (i32, i32) {
    %c0_i32 = arith.constant 0 : i32
    %c0_i32_0 = arith.constant 0 : i32
    return %c0_i32, %arg0 : i32, i32
  }
  func.func @transform_2(%arg0: i32, %arg1: i32) -> (i32, i32) {
    %c0_i32 = arith.constant 0 : i32
    return %arg1, %arg0 : i32, i32
  }
}

</mosaic_0001>

<llo_original>
// kernel: positional_encoding_forward.1
$region0: #{positional_encoding_forward.1}
  #allocation0 [shape = 'u32[]', space=smem, size = 0x4, offset = 0x4, fixed_abs, tag = 'smem constant byte address 0x4 - core index']
  #allocation1 [shape = 'u32[144,128]{1,0:T(1,128)}', space=vmem, size = 0x12000, scoped, tag = 'internal scratch']
  %s0 = inlined_call_operand.vmem [shape: f32[2,256], index: 0, kind: input, shape index: {}]
  %s1 = inlined_call_operand.vmem [shape: f32[1,256], index: 1, kind: input, shape index: {}]
  %s2 = inlined_call_operand.vmem [shape: f32[2,256], index: 2, kind: output, shape index: {}]
  %s3 = sld [smem:[#allocation0]]
  $region18: #{positional_encoding_forward.1} parent=0
    _
  %s5 = ssub.s32 1, %s3
  %s6 = scalar_select 0, %s5, %s3
  // Predicated region
  $region2: #{positional_encoding_forward.1} parent=0 // pred_check
    _
  $region3: #{positional_encoding_forward.1} parent=0 // pred_check_branch
    %8 = sbr.rel (0) target = $region5
  $region4: #{positional_encoding_forward.1} parent=0 // pred_region
    _
  $region5: #{positional_encoding_forward.1} parent=0 // pred_fallthru
    _
  // Predicated region
  $region6: #{positional_encoding_forward.1} parent=0 // pred_check
    _
  $region7: #{positional_encoding_forward.1} parent=0 // pred_check_branch
    %10 = sbr.rel (0) target = $region9
  $region8: #{positional_encoding_forward.1} parent=0 // pred_region
    _
  $region9: #{positional_encoding_forward.1} parent=0 // pred_fallthru
    _
  %v11 = vld [vmem:[%s0] sm:$0xf]
  %v12 = vld [vmem:[%s1] sm:$0x3]
  %v14 = vlaneseq
  %v15 = vshrl.u32 %v14, 7
  %v16 = vsub.s32 0, %v15
  %v17 = vrot.slane %v12, %v16
  %v18 = vlaneseq
  %v19 = vshrl.u32 %v18, 7
  %v20 = vsub.s32 1, %v19
  %v21 = vrot.slane %v12, %v20
  %v22 = vcombine.low %v17, %v21
  %v24 = vunpack.c.l.s4 1983009808
  %v25 = vunpack.c.0.s8 %v24
  %v26 = vlaneseq
  %v27 = vshrl.u32 %v26, 7
  %v28 = vsub.s32 %v25, %v27
  %v29 = vrot.slane %v22, %v28
  %v31 = vadd.f32 %v11, %v29
  %32 = vst [vmem:[%s2] sm:$0xf] %v31
  // Predicated region
  $region10: #{positional_encoding_forward.1} parent=0 // pred_check
    _
  $region11: #{positional_encoding_forward.1} parent=0 // pred_check_branch
    %34 = sbr.rel (0) target = $region13
  $region12: #{positional_encoding_forward.1} parent=0 // pred_region
    _
  $region13: #{positional_encoding_forward.1} parent=0 // pred_fallthru
    _
  // Predicated region
  $region14: #{positional_encoding_forward.1} parent=0 // pred_check
    _
  $region15: #{positional_encoding_forward.1} parent=0 // pred_check_branch
    %36 = sbr.rel (0) target = $region17
  $region16: #{positional_encoding_forward.1} parent=0 // pred_region
    _
  $region17: #{positional_encoding_forward.1} parent=0 // pred_fallthru
    _

</llo_original>
